<compile_context>
chip_gen: v7x
topology: tpu7x:2x2x1
jax: 0.10.0
libtpu: 0.0.40
codegen_flags: <defaults>
</compile_context>

<pallas_src>
import functools

import jax
import jax.numpy as jnp
from jax import lax
from jax.experimental import pallas as pl
from jax.experimental.pallas import tpu as pltpu


def _round_up(n, m):
    return ((n + m - 1) // m) * m


def _cdiv(a, b):
    return (a + b - 1) // b


def _critic_kernel(s_ref, a_ref, w1s_ref, w1a_ref, b1_ref, w2_ref, b2_ref,
                   w3_ref, b3_ref, out_ref):
    """Fused 3-layer MLP on one batch tile.

    h1  = relu(state@W1s + action@W1a + b1)   (concat fused via split fc1)
    h2  = relu(h1@W2 + b2)
    q^T = W3_row * h2^T + b3                  (lane-dense (1, bm) epilogue)
    """
    wd = w1s_ref.dtype                     # matmul operand dtype (f32 or bf16)
    s = s_ref[...].astype(wd)              # (bm, n_inputs)
    a = a_ref[...].astype(wd)              # (bm, n_actions)

    h1 = jnp.dot(s, w1s_ref[...], preferred_element_type=jnp.float32)
    h1 = h1 + jnp.dot(a, w1a_ref[...], preferred_element_type=jnp.float32)
    h1 = jnp.maximum(h1 + b1_ref[...], 0.0)                     # (bm, H) f32

    h2 = jnp.dot(h1.astype(wd), w2_ref[...],
                 preferred_element_type=jnp.float32)
    h2 = jnp.maximum(h2 + b2_ref[...], 0.0)                     # (bm, H) f32

    # fc3 as an NT matmul: (1, H) x (bm, H)^T -> (1, bm); batch lands on the
    # 128-lane axis so the store is (nearly) unmasked instead of bm/8 vst.msk.
    q_t = lax.dot_general(w3_ref[...], h2.astype(wd),
                          dimension_numbers=(((1,), (1,)), ((), ())),
                          preferred_element_type=jnp.float32)   # (1, bm)
    q_t = q_t + b3_ref[0, 0]                                    # scalar from SMEM
    out_ref[...] = q_t.astype(out_ref.dtype)


@functools.partial(jax.jit, static_argnames=("block_m",))
def critic_forward(state, action, params, *, block_m=2048):
    """Batched critic forward.  state: (B, n_inputs), action: (B, n_actions)."""
    w1s, w1a, b1, w2, b2, w3, b3 = params
    B, n_inputs = state.shape
    n_actions = action.shape[1]
    n_hidden = w2.shape[0]

    # Tile selection (no input padding; the non-divisible grid handles the tail):
    #  * >= 2 tiles whenever B allows -> both v7x TensorCores get work,
    #  * tiles as large as possible (<= block_m) -> amortize per-step overhead,
    #  * near-equal tile sizes -> minimal wasted work in the tail tile.
    n_tiles_target = max(2, _cdiv(B, block_m))
    bm = min(_round_up(_cdiv(B, n_tiles_target), 8), _round_up(B, 8))
    num_tiles = _cdiv(B, bm)
    grid = (num_tiles,)

    # Activations: tiled over batch (double-buffered by Pallas).
    # Weights/biases: constant index maps -> resident in VMEM; b3 scalar -> SMEM.
    in_specs = [
        pl.BlockSpec((bm, n_inputs), lambda i: (i, 0)),          # state tile
        pl.BlockSpec((bm, n_actions), lambda i: (i, 0)),         # action tile
        pl.BlockSpec((n_inputs, n_hidden), lambda i: (0, 0)),    # W1_state
        pl.BlockSpec((n_actions, n_hidden), lambda i: (0, 0)),   # W1_action
        pl.BlockSpec((1, n_hidden), lambda i: (0, 0)),           # b1 (f32)
        pl.BlockSpec((n_hidden, n_hidden), lambda i: (0, 0)),    # W2
        pl.BlockSpec((1, n_hidden), lambda i: (0, 0)),           # b2 (f32)
        pl.BlockSpec((1, n_hidden), lambda i: (0, 0)),           # W3 row (1, H)
        pl.BlockSpec((1, 1), lambda i: (0, 0),
                     memory_space=pltpu.MemorySpace.SMEM),       # b3 scalar
    ]
    # Lane-dense output: one (1, bm) row per tile; leading tile axis squeezed.
    out_specs = pl.BlockSpec((None, 1, bm), lambda i: (i, 0, 0))

    q_tiles = pl.pallas_call(
        _critic_kernel,
        out_shape=jax.ShapeDtypeStruct((num_tiles, 1, bm), jnp.float32),
        grid=grid,
        in_specs=in_specs,
        out_specs=out_specs,
        compiler_params=pltpu.CompilerParams(
            dimension_semantics=("parallel",),
        ),
    )(state, action, w1s, w1a, b1, w2, b2, w3, b3)

    # Tail rows (indices >= B) of the last tile are garbage; slice them off.
    return q_tiles.reshape(num_tiles * bm)[:B].reshape(B, 1)


def init_critic_params(key, n_inputs, n_actions, n_hidden, dtype=jnp.float32):
    """Deterministic init matching PyTorch init_layer():
       uniform(-sc, sc) with sc = 1/sqrt(out_features) for fc1/fc2, 0.003 for fc3.
       Weights stored as (in, out); fc1 weight is split into state/action parts
       (fused concat); fc3 weight stored as a (1, n_hidden) row.  `dtype` applies
       to the matmul weights (use jnp.bfloat16 on v6e/v7x); biases stay f32."""
    d_in = n_inputs + n_actions
    k1, k2, k3, k4, k5, k6 = jax.random.split(key, 6)

    sc1 = 1.0 / jnp.sqrt(jnp.float32(n_hidden))   # fc1 weight.size(0) == n_hidden
    sc2 = 1.0 / jnp.sqrt(jnp.float32(n_hidden))   # fc2 weight.size(0) == n_hidden
    sc3 = jnp.float32(0.003)                      # fc3 explicit sc

    w1 = jax.random.uniform(k1, (d_in, n_hidden), jnp.float32, -sc1, sc1)
    w1s, w1a = w1[:n_inputs], w1[n_inputs:]       # split fc1 for fused concat
    b1 = jax.random.uniform(k2, (1, n_hidden), jnp.float32, -sc1, sc1)
    w2 = jax.random.uniform(k3, (n_hidden, n_hidden), jnp.float32, -sc2, sc2)
    b2 = jax.random.uniform(k4, (1, n_hidden), jnp.float32, -sc2, sc2)
    w3 = jax.random.uniform(k5, (1, n_hidden), jnp.float32, -sc3, sc3)
    b3 = jax.random.uniform(k6, (1, 1), jnp.float32, -sc3, sc3)
    return (w1s.astype(dtype), w1a.astype(dtype), b1,
            w2.astype(dtype), b2, w3.astype(dtype), b3)


def _reference_forward(state, action, params):
    """Plain-JAX reference (identical to the PyTorch forward)."""
    w1s, w1a, b1, w2, b2, w3, b3 = params
    w1 = jnp.concatenate([w1s, w1a], axis=0).astype(jnp.float32)
    x0 = jnp.concatenate([state, action], axis=1)
    h1 = jnp.maximum(x0 @ w1 + b1, 0.0)
    h2 = jnp.maximum(h1 @ w2.astype(jnp.float32) + b2, 0.0)
    return h2 @ w3.astype(jnp.float32).T + b3


if __name__ == "__main__":
    # Small shapes consistent with the module.
    batch, n_inputs, n_actions, n_hidden = 8, 24, 8, 32

    key = jax.random.PRNGKey(0)
    kp, ks, ka = jax.random.split(key, 3)

    params = init_critic_params(kp, n_inputs, n_actions, n_hidden)

    # Case 1: tiny batch (single grid step).
    state = jax.random.normal(ks, (batch, n_inputs), jnp.float32)
    action = jax.random.normal(ka, (batch, n_actions), jnp.float32)
    q = jax.block_until_ready(critic_forward(state, action, params))
    q_ref = _reference_forward(state, action, params)
    assert q.shape == (batch, 1)
    assert jnp.allclose(q, q_ref, atol=1e-5, rtol=1e-5), "mismatch (small batch)"

    # Case 2: larger, non-aligned batch -> 2 near-equal tiles + partial tail block.
    big_batch = 1037
    ks2, ka2 = jax.random.split(jax.random.PRNGKey(1), 2)
    state2 = jax.random.normal(ks2, (big_batch, n_inputs), jnp.float32)
    action2 = jax.random.normal(ka2, (big_batch, n_actions), jnp.float32)
    q2 = jax.block_until_ready(critic_forward(state2, action2, params))
    q2_ref = _reference_forward(state2, action2, params)
    assert q2.shape == (big_batch, 1)
    assert jnp.allclose(q2, q2_ref, atol=1e-4, rtol=1e-4), "mismatch (big batch)"

    # Case 3: bf16 weights (native-rate MXU on v6e/v7x); accumulation stays f32.
    params_bf16 = init_critic_params(kp, n_inputs, n_actions, n_hidden,
                                     dtype=jnp.bfloat16)
    q3 = jax.block_until_ready(critic_forward(state2, action2, params_bf16))
    q3_ref = _reference_forward(state2, action2, params_bf16)
    assert q3.shape == (big_batch, 1)
    assert bool(jnp.all(jnp.isfinite(q3)))
    assert jnp.allclose(q3, q3_ref, atol=2e-2, rtol=2e-2), "mismatch (bf16)"

    print("KERNEL_OK")
</pallas_src>

<mosaic_0001>
module attributes {stable_mosaic.version = 11 : i64} {
  func.func @_critic_kernel(%arg0: i32, %arg1: memref<8x24xf32, #tpu.memory_space<vmem>>, %arg2: memref<8x8xf32, #tpu.memory_space<vmem>>, %arg3: memref<24x32xf32, #tpu.memory_space<vmem>>, %arg4: memref<8x32xf32, #tpu.memory_space<vmem>>, %arg5: memref<1x32xf32, #tpu.memory_space<vmem>>, %arg6: memref<32x32xf32, #tpu.memory_space<vmem>>, %arg7: memref<1x32xf32, #tpu.memory_space<vmem>>, %arg8: memref<1x32xf32, #tpu.memory_space<vmem>>, %arg9: memref<1x1xf32, #tpu.memory_space<smem>>, %arg10: memref<1x1x8xf32, #tpu.memory_space<vmem>>) attributes {dimension_semantics = [#tpu.dimension_semantics<parallel>], iteration_bounds = array<i64: 1>, scalar_prefetch = 0 : i64, scratch_operands = 0 : i64, tpu.core_type = #tpu.core_type<tc>, window_params = [{transform_indices = @transform_0, window_bounds = array<i64: 8, 24>}, {transform_indices = @transform_1, window_bounds = array<i64: 8, 8>}, {pipeline_mode = #tpu.pipeline_mode<synchronous>, transform_indices = @transform_2, window_bounds = array<i64: 24, 32>}, {pipeline_mode = #tpu.pipeline_mode<synchronous>, transform_indices = @transform_3, window_bounds = array<i64: 8, 32>}, {pipeline_mode = #tpu.pipeline_mode<synchronous>, transform_indices = @transform_4, window_bounds = array<i64: 1, 32>}, {pipeline_mode = #tpu.pipeline_mode<synchronous>, transform_indices = @transform_5, window_bounds = array<i64: 32, 32>}, {pipeline_mode = #tpu.pipeline_mode<synchronous>, transform_indices = @transform_6, window_bounds = array<i64: 1, 32>}, {pipeline_mode = #tpu.pipeline_mode<synchronous>, transform_indices = @transform_7, window_bounds = array<i64: 1, 32>}, {transform_indices = @transform_8, window_bounds = array<i64: 1, 1>}, {transform_indices = @transform_9, window_bounds = array<i64: 1, 1, 8>}]} {
    %c0 = arith.constant 0 : index
    %c0_0 = arith.constant 0 : index
    %0 = vector.load %arg1[%c0, %c0_0] : memref<8x24xf32, #tpu.memory_space<vmem>>, vector<8x24xf32>
    %c0_1 = arith.constant 0 : index
    %c0_2 = arith.constant 0 : index
    %1 = vector.load %arg2[%c0_1, %c0_2] : memref<8x8xf32, #tpu.memory_space<vmem>>, vector<8x8xf32>
    %c0_3 = arith.constant 0 : index
    %c0_4 = arith.constant 0 : index
    %2 = vector.load %arg3[%c0_3, %c0_4] : memref<24x32xf32, #tpu.memory_space<vmem>>, vector<24x32xf32>
    %cst = arith.constant dense<0.000000e+00> : vector<8x32xf32>
    %3 = tpu.matmul %0, %2, %cst {dimension_numbers = #tpu.dot_dimension_numbers<[1], [0], [0], [1], [0, 0, 1, 1], [], []>} : vector<8x24xf32>, vector<24x32xf32>, vector<8x32xf32> -> vector<8x32xf32>
    %c0_5 = arith.constant 0 : index
    %c0_6 = arith.constant 0 : index
    %4 = vector.load %arg4[%c0_5, %c0_6] : memref<8x32xf32, #tpu.memory_space<vmem>>, vector<8x32xf32>
    %cst_7 = arith.constant dense<0.000000e+00> : vector<8x32xf32>
    %5 = tpu.matmul %1, %4, %cst_7 {dimension_numbers = #tpu.dot_dimension_numbers<[1], [0], [0], [1], [0, 0, 1, 1], [], []>} : vector<8x8xf32>, vector<8x32xf32>, vector<8x32xf32> -> vector<8x32xf32>
    %6 = arith.addf %3, %5 : vector<8x32xf32>
    %c0_8 = arith.constant 0 : index
    %c0_9 = arith.constant 0 : index
    %7 = vector.load %arg5[%c0_8, %c0_9] : memref<1x32xf32, #tpu.memory_space<vmem>>, vector<1x32xf32>
    %8 = vector.broadcast %7 : vector<1x32xf32> to vector<8x32xf32>
    %9 = arith.addf %6, %8 : vector<8x32xf32>
    %cst_10 = arith.constant 0.000000e+00 : f32
    %10 = vector.broadcast %cst_10 : f32 to vector<8x32xf32>
    %11 = arith.maximumf %9, %10 : vector<8x32xf32>
    %c0_11 = arith.constant 0 : index
    %c0_12 = arith.constant 0 : index
    %12 = vector.load %arg6[%c0_11, %c0_12] : memref<32x32xf32, #tpu.memory_space<vmem>>, vector<32x32xf32>
    %cst_13 = arith.constant dense<0.000000e+00> : vector<8x32xf32>
    %13 = tpu.matmul %11, %12, %cst_13 {dimension_numbers = #tpu.dot_dimension_numbers<[1], [0], [0], [1], [0, 0, 1, 1], [], []>} : vector<8x32xf32>, vector<32x32xf32>, vector<8x32xf32> -> vector<8x32xf32>
    %c0_14 = arith.constant 0 : index
    %c0_15 = arith.constant 0 : index
    %14 = vector.load %arg7[%c0_14, %c0_15] : memref<1x32xf32, #tpu.memory_space<vmem>>, vector<1x32xf32>
    %15 = vector.broadcast %14 : vector<1x32xf32> to vector<8x32xf32>
    %16 = arith.addf %13, %15 : vector<8x32xf32>
    %cst_16 = arith.constant 0.000000e+00 : f32
    %17 = vector.broadcast %cst_16 : f32 to vector<8x32xf32>
    %18 = arith.maximumf %16, %17 : vector<8x32xf32>
    %c0_17 = arith.constant 0 : index
    %c0_18 = arith.constant 0 : index
    %19 = vector.load %arg8[%c0_17, %c0_18] : memref<1x32xf32, #tpu.memory_space<vmem>>, vector<1x32xf32>
    %cst_19 = arith.constant dense<0.000000e+00> : vector<1x8xf32>
    %20 = tpu.matmul %19, %18, %cst_19 {dimension_numbers = #tpu.dot_dimension_numbers<[1], [1], [0], [0], [0, 0, 1, 0], [], []>} : vector<1x32xf32>, vector<8x32xf32>, vector<1x8xf32> -> vector<1x8xf32>
    %c0_20 = arith.constant 0 : index
    %c0_21 = arith.constant 0 : index
    %21 = memref.load %arg9[%c0_20, %c0_21] : memref<1x1xf32, #tpu.memory_space<smem>>
    %22 = vector.broadcast %21 : f32 to vector<1x8xf32>
    %23 = arith.addf %20, %22 : vector<1x8xf32>
    %c0_22 = arith.constant 0 : index
    %c0_23 = arith.constant 0 : index
    %c0_24 = arith.constant 0 : index
    %24 = vector.load %arg10[%c0_22, %c0_23, %c0_24] : memref<1x1x8xf32, #tpu.memory_space<vmem>>, vector<1x1x8xf32>
    %25 = vector.shape_cast %24 : vector<1x1x8xf32> to vector<1x8xf32>
    %26 = vector.shape_cast %23 : vector<1x8xf32> to vector<1x1x8xf32>
    tpu.vector_store %arg10[%c0_22, %c0_23, %c0_24], %26 {strides = array<i32>} : memref<1x1x8xf32, #tpu.memory_space<vmem>>, vector<1x1x8xf32>,
    return
  }
  func.func @transform_0(%arg0: i32) -> (i32, i32) {
    %c0_i32 = arith.constant 0 : i32
    %c0_i32_0 = arith.constant 0 : i32
    return %arg0, %c0_i32 : i32, i32
  }
  func.func @transform_1(%arg0: i32) -> (i32, i32) {
    %c0_i32 = arith.constant 0 : i32
    %c0_i32_0 = arith.constant 0 : i32
    return %arg0, %c0_i32 : i32, i32
  }
  func.func @transform_2(%arg0: i32) -> (i32, i32) {
    %c0_i32 = arith.constant 0 : i32
    %c0_i32_0 = arith.constant 0 : i32
    %c0_i32_1 = arith.constant 0 : i32
    return %c0_i32, %c0_i32_0 : i32, i32
  }
  func.func @transform_3(%arg0: i32) -> (i32, i32) {
    %c0_i32 = arith.constant 0 : i32
    %c0_i32_0 = arith.constant 0 : i32
    %c0_i32_1 = arith.constant 0 : i32
    return %c0_i32, %c0_i32_0 : i32, i32
  }
  func.func @transform_4(%arg0: i32) -> (i32, i32) {
    %c0_i32 = arith.constant 0 : i32
    %c0_i32_0 = arith.constant 0 : i32
    %c0_i32_1 = arith.constant 0 : i32
    return %c0_i32, %c0_i32_0 : i32, i32
  }
  func.func @transform_5(%arg0: i32) -> (i32, i32) {
    %c0_i32 = arith.constant 0 : i32
    %c0_i32_0 = arith.constant 0 : i32
    %c0_i32_1 = arith.constant 0 : i32
    return %c0_i32, %c0_i32_0 : i32, i32
  }
  func.func @transform_6(%arg0: i32) -> (i32, i32) {
    %c0_i32 = arith.constant 0 : i32
    %c0_i32_0 = arith.constant 0 : i32
    %c0_i32_1 = arith.constant 0 : i32
    return %c0_i32, %c0_i32_0 : i32, i32
  }
  func.func @transform_7(%arg0: i32) -> (i32, i32) {
    %c0_i32 = arith.constant 0 : i32
    %c0_i32_0 = arith.constant 0 : i32
    %c0_i32_1 = arith.constant 0 : i32
    return %c0_i32, %c0_i32_0 : i32, i32
  }
  func.func @transform_8(%arg0: i32) -> (i32, i32) {
    %c0_i32 = arith.constant 0 : i32
    %c0_i32_0 = arith.constant 0 : i32
    %c0_i32_1 = arith.constant 0 : i32
    return %c0_i32, %c0_i32_0 : i32, i32
  }
  func.func @transform_9(%arg0: i32) -> (i32, i32, i32) {
    %c0_i32 = arith.constant 0 : i32
    %c0_i32_0 = arith.constant 0 : i32
    %c0_i32_1 = arith.constant 0 : i32
    return %arg0, %c0_i32, %c0_i32_0 : i32, i32, i32
  }
}

</mosaic_0001>

<llo_original>
// kernel: critic_forward.1
$region0: #{critic_forward.1}
  #allocation0 [shape = 'u32[]', space=smem, size = 0x4, offset = 0x4, fixed_abs, tag = 'smem constant byte address 0x4 - core index']
  #allocation1 [shape = 'u32[144,128]{1,0:T(1,128)}', space=vmem, size = 0x12000, scoped, tag = 'internal scratch']
  #allocation2 [shape = 'f32[1,1]{1,0:T(1,128)S(6)}', space=smem, size = 0x200, scoped, tag = 'scoped memory for critic_forward.1']
  %s0 = inlined_call_operand.hbm [shape: f32[8,24], index: 0, kind: input, shape index: {}]
  %s1 = inlined_call_operand.hbm [shape: f32[8,8], index: 1, kind: input, shape index: {}]
  %s2 = inlined_call_operand.hbm [shape: f32[24,32], index: 2, kind: input, shape index: {}]
  %s3 = inlined_call_operand.vmem [shape: f32[8,32], index: 3, kind: input, shape index: {}]
  %s4 = inlined_call_operand.vmem [shape: f32[1,32], index: 4, kind: input, shape index: {}]
  %s5 = inlined_call_operand.hbm [shape: f32[32,32], index: 5, kind: input, shape index: {}]
  %s6 = inlined_call_operand.vmem [shape: f32[1,32], index: 6, kind: input, shape index: {}]
  %s7 = inlined_call_operand.vmem [shape: f32[1,32], index: 7, kind: input, shape index: {}]
  %s8 = inlined_call_operand.<no memory space> [shape: f32[1,1], index: 8, kind: input, shape index: {}]
  %s9 = inlined_call_operand.hbm [shape: f32[1,1,8], index: 9, kind: output, shape index: {}]
  %s10 = sld [smem:[#allocation0]]
  $region62: #{critic_forward.1} parent=0
    _
  %s12 = ssub.s32 1, %s10
  %s13 = scalar_select 0, %s12, %s10
  %14 = sst [smem:[#allocation2]] %s8
  $region1: #{critic_forward.1} parent=0
    #allocation3 [shape = 'u8[4096]{0}', space=vmem, size = 0x1000, scoped, tag = 'input window, operand 0, single buffered']
    #allocation4 [shape = 's32[1]{0}', space=sflag, size = 0x4, scoped, tag = 'scoped memory for critic_forward.1']
    #allocation5 [shape = 's32[1]{0}', space=sflag, size = 0x4, scoped, tag = 'scoped memory for critic_forward.1']
    #allocation6 [shape = 'u8[4096]{0}', space=vmem, size = 0x1000, scoped, tag = 'input window, operand 1, single buffered']
    #allocation7 [shape = 's32[1]{0}', space=sflag, size = 0x4, scoped, tag = 'scoped memory for critic_forward.1']
    #allocation8 [shape = 'u8[12288]{0}', space=vmem, size = 0x3000, scoped, tag = 'input window, operand 2, single buffered']
    #allocation9 [shape = 'u8[16384]{0}', space=vmem, size = 0x4000, scoped, tag = 'input window, operand 5, single buffered']
    #allocation10 [shape = 's32[1]{0}', space=sflag, size = 0x4, scoped, tag = 'scoped memory for critic_forward.1']
    #allocation11 [shape = 'u8[512]{0}', space=vmem, size = 0x400, scoped, tag = 'output window, operand 0, single buffered']
    %15 = vsyncpa [#allocation4], 0
    %16 = vsyncpa [#allocation7], 0
    %17 = vsyncpa [#allocation10], 0
    %18 = vsyncpa [#allocation5], 0
    // Predicated region
    $region2: #{critic_forward.1} parent=1 // pred_check
      _
    $region3: #{critic_forward.1} parent=1 // pred_check_branch
      %20 = sbr.rel (0) target = $region5
    $region4: #{critic_forward.1} parent=1 // pred_region
      %s22 = ssub.s32 128, 128
      %23 = vsyncadd [#allocation4], %s22
      %s25 = sshll.u32 [#allocation3], 4
      %s26 = int_to_ptr.vmem [resolvable:$true] %s25
      %28 = dma.hbm_to_vmem [thread:$0]  %s0, 128, %s26, [#allocation4]
    $region5: #{critic_forward.1} parent=1 // pred_fallthru
      _
    // Predicated region
    $region6: #{critic_forward.1} parent=1 // pred_check
      _
    $region7: #{critic_forward.1} parent=1 // pred_check_branch
      %30 = sbr.rel (0) target = $region9
    $region8: #{critic_forward.1} parent=1 // pred_region
      %s32 = ssub.s32 128, 128
      %33 = vsyncadd [#allocation7], %s32
      %s35 = sshll.u32 [#allocation6], 4
      %s36 = int_to_ptr.vmem [resolvable:$true] %s35
      %38 = dma.hbm_to_vmem [thread:$0]  %s1, 128, %s36, [#allocation7]
    $region9: #{critic_forward.1} parent=1 // pred_fallthru
      _
    // Predicated region
    $region10: #{critic_forward.1} parent=1 // pred_check
      _
    $region11: #{critic_forward.1} parent=1 // pred_check_branch
      %40 = sbr.rel (0) target = $region13
    $region12: #{critic_forward.1} parent=1 // pred_region
      %s42 = ssub.s32 384, 384
      %43 = vsyncadd [#allocation7], %s42
      %s44 = sshll.u32 [#allocation8], 4
      %s45 = int_to_ptr.vmem [resolvable:$true] %s44
      %50 = dma.hbm_to_vmem [thread:$0]  %s2, 384, %s45, [#allocation7], 128, 128, 8
    $region13: #{critic_forward.1} parent=1 // pred_fallthru
      _
    // Predicated region
    $region14: #{critic_forward.1} parent=1 // pred_check
      _
    $region15: #{critic_forward.1} parent=1 // pred_check_branch
      %52 = sbr.rel (0) target = $region17
    $region16: #{critic_forward.1} parent=1 // pred_region
      _
    $region17: #{critic_forward.1} parent=1 // pred_fallthru
      _
    // Predicated region
    $region18: #{critic_forward.1} parent=1 // pred_check
      _
    $region19: #{critic_forward.1} parent=1 // pred_check_branch
      %54 = sbr.rel (0) target = $region21
    $region20: #{critic_forward.1} parent=1 // pred_region
      _
    $region21: #{critic_forward.1} parent=1 // pred_fallthru
      _
    // Predicated region
    $region22: #{critic_forward.1} parent=1 // pred_check
      _
    $region23: #{critic_forward.1} parent=1 // pred_check_branch
      %56 = sbr.rel (0) target = $region25
    $region24: #{critic_forward.1} parent=1 // pred_region
      %s58 = ssub.s32 512, 512
      %59 = vsyncadd [#allocation10], %s58
      %s60 = sshll.u32 [#allocation9], 4
      %s61 = int_to_ptr.vmem [resolvable:$true] %s60
      %66 = dma.hbm_to_vmem [thread:$0]  %s5, 512, %s61, [#allocation10], 128, 128, 8
    $region25: #{critic_forward.1} parent=1 // pred_fallthru
      _
    // Predicated region
    $region26: #{critic_forward.1} parent=1 // pred_check
      _
    $region27: #{critic_forward.1} parent=1 // pred_check_branch
      %68 = sbr.rel (0) target = $region29
    $region28: #{critic_forward.1} parent=1 // pred_region
      _
    $region29: #{critic_forward.1} parent=1 // pred_fallthru
      _
    // Predicated region
    $region30: #{critic_forward.1} parent=1 // pred_check
      _
    $region31: #{critic_forward.1} parent=1 // pred_check_branch
      %70 = sbr.rel (0) target = $region33
    $region32: #{critic_forward.1} parent=1 // pred_region
      _
    $region33: #{critic_forward.1} parent=1 // pred_fallthru
      _
    // Predicated region
    $region34: #{critic_forward.1} parent=1 // pred_check
      _
    $region35: #{critic_forward.1} parent=1 // pred_check_branch
      %72 = sbr.rel (0) target = $region37
    $region36: #{critic_forward.1} parent=1 // pred_region
      _
    $region37: #{critic_forward.1} parent=1 // pred_fallthru
      _
    // Predicated region
    $region38: #{critic_forward.1} parent=1 // pred_check
      _
    $region39: #{critic_forward.1} parent=1 // pred_check_branch
      %74 = sbr.rel (0) target = $region41
    $region40: #{critic_forward.1} parent=1 // pred_region
      %75 = dma.done [#allocation4], 128
    $region41: #{critic_forward.1} parent=1 // pred_fallthru
      _
    // Predicated region
    $region42: #{critic_forward.1} parent=1 // pred_check
      _
    $region43: #{critic_forward.1} parent=1 // pred_check_branch
      %77 = sbr.rel (0) target = $region45
    $region44: #{critic_forward.1} parent=1 // pred_region
      %78 = dma.done [#allocation7], 128
    $region45: #{critic_forward.1} parent=1 // pred_fallthru
      _
    // Predicated region
    $region46: #{critic_forward.1} parent=1 // pred_check
      _
    $region47: #{critic_forward.1} parent=1 // pred_check_branch
      %80 = sbr.rel (0) target = $region49
    $region48: #{critic_forward.1} parent=1 // pred_region
      %81 = dma.done [#allocation7], 384
    $region49: #{critic_forward.1} parent=1 // pred_fallthru
      _
    // Predicated region
    $region50: #{critic_forward.1} parent=1 // pred_check
      _
    $region51: #{critic_forward.1} parent=1 // pred_check_branch
      %83 = sbr.rel (0) target = $region53
    $region52: #{critic_forward.1} parent=1 // pred_region
      %84 = dma.done [#allocation10], 512
    $region53: #{critic_forward.1} parent=1 // pred_fallthru
      _
    %v85 = vld [vmem:[#allocation3] sm:$0xff]
    %v86 = vld [vmem:[#allocation6] sm:$0xff]
    %v87 = vld [vmem:[#allocation8] sm:$0xff]
    %v88 = vld [vmem:[#allocation8 + $0x8] sm:$0xff]
    %v89 = vld [vmem:[#allocation8 + $0x10] sm:$0xff]
    %v90 = vld [vmem:[%s3] sm:$0xff]
    %vm91 = vcmask 64512
    %v93 = vsel %vm91, %v86, 0
    %95 = vmatprep.subr.mxu0 0.0
    %96 = vmatpush1.msra.mxu0 %v90
    %97 = vmatprep.subr.mxu0 0.0
    %98 = vmatpush1.msra.mxu0 0.0
    %99 = vmatprep.subr.mxu0 0.0
    %100 = vmatpush1.msra.mxu0 0.0
    %101 = vmatprep.subr.mxu0 0.0
    %102 = vmatpush1.msra.mxu0 0.0
    %103 = vmatprep.subr.mxu0 0.0
    %104 = vmatpush1.msra.mxu0 0.0
    %105 = vmatprep.subr.mxu0 0.0
    %106 = vmatpush1.msra.mxu0 0.0
    %107 = vmatprep.subr.mxu0 0.0
    %108 = vmatpush1.msra.mxu0 0.0
    %109 = vmatprep.subr.mxu0 0.0
    %110 = vmatpush1.msra.mxu0 0.0
    %111 = vmatprep.subr.mxu0 0.0
    %112 = vmatpush1.msra.mxu0 0.0
    %113 = vmatprep.subr.mxu0 0.0
    %114 = vmatpush1.msra.mxu0 0.0
    %115 = vmatprep.subr.mxu0 0.0
    %116 = vmatpush1.msra.mxu0 0.0
    %117 = vmatprep.subr.mxu0 0.0
    %118 = vmatpush1.msra.mxu0 0.0
    %119 = vmatprep.subr.mxu0 0.0
    %120 = vmatpush1.msra.mxu0 0.0
    %121 = vmatprep.subr.mxu0 0.0
    %122 = vmatpush1.msra.mxu0 0.0
    %123 = vmatprep.subr.mxu0 0.0
    %124 = vmatpush1.msra.mxu0 0.0
    %125 = vmatprep.subr.mxu0 0.0
    %126 = vmatpush1.msra.mxu0 0.0
    %127 = vmatprep.subr.mxu0 0.0
    %128 = vmatpush1.msra.mxu0 0.0
    %129 = vmatprep.subr.mxu0 0.0
    %130 = vmatpush1.msra.mxu0 0.0
    %131 = vmatprep.subr.mxu0 0.0
    %132 = vmatpush1.msra.mxu0 0.0
    %133 = vmatprep.subr.mxu0 0.0
    %134 = vmatpush1.msra.mxu0 0.0
    %135 = vmatprep.subr.mxu0 0.0
    %136 = vmatpush1.msra.mxu0 0.0
    %137 = vmatprep.subr.mxu0 0.0
    %138 = vmatpush1.msra.mxu0 0.0
    %139 = vmatprep.subr.mxu0 0.0
    %140 = vmatpush1.msra.mxu0 0.0
    %141 = vmatprep.subr.mxu0 0.0
    %142 = vmatpush1.msra.mxu0 0.0
    %143 = vmatprep.subr.mxu0 0.0
    %144 = vmatpush1.msra.mxu0 0.0
    %145 = vmatprep.subr.mxu0 0.0
    %146 = vmatpush1.msra.mxu0 0.0
    %147 = vmatprep.subr.mxu0 0.0
    %148 = vmatpush1.msra.mxu0 0.0
    %149 = vmatprep.subr.mxu0 0.0
    %150 = vmatpush1.msra.mxu0 0.0
    %151 = vmatprep.subr.mxu0 0.0
    %152 = vmatpush1.msra.mxu0 0.0
    %153 = vmatprep.subr.mxu0 0.0
    %154 = vmatpush1.msra.mxu0 0.0
    %155 = vmatprep.subr.mxu0 0.0
    %156 = vmatpush1.msra.mxu0 0.0
    %157 = vmatprep.subr.mxu0 0.0
    %158 = vmatpush1.msra.mxu0 0.0
    %159 = vmatprep.mubr.f32.mxu0 0.0
    %160 = vmatmul.mubr.f32.gmra.mrb[0].mxu0 %v93
    %v161 = vpop.f32.mrb[0].mxu0
    %v162 = vadd.f32 0.0, %v161
    %v163 = vpop.f32.mrb[0].mxu0
    %164 = vdwg.mxu0
    %vm165 = vcmask 195584
    %v167 = vsel %vm165, %v85, 0
    %169 = vmatprep.subr.mxu0 0.0
    %170 = vmatpush1.msra.mxu0 %v87
    %171 = vmatprep.subr.mxu0 0.0
    %172 = vmatpush1.msra.mxu0 %v88
    %173 = vmatprep.subr.mxu0 0.0
    %174 = vmatpush1.msra.mxu0 %v89
    %175 = vmatprep.subr.mxu0 0.0
    %176 = vmatpush1.msra.mxu0 0.0
    %177 = vmatprep.subr.mxu0 0.0
    %178 = vmatpush1.msra.mxu0 0.0
    %179 = vmatprep.subr.mxu0 0.0
    %180 = vmatpush1.msra.mxu0 0.0
    %181 = vmatprep.subr.mxu0 0.0
    %182 = vmatpush1.msra.mxu0 0.0
    %183 = vmatprep.subr.mxu0 0.0
    %184 = vmatpush1.msra.mxu0 0.0
    %185 = vmatprep.subr.mxu0 0.0
    %186 = vmatpush1.msra.mxu0 0.0
    %187 = vmatprep.subr.mxu0 0.0
    %188 = vmatpush1.msra.mxu0 0.0
    %189 = vmatprep.subr.mxu0 0.0
    %190 = vmatpush1.msra.mxu0 0.0
    %191 = vmatprep.subr.mxu0 0.0
    %192 = vmatpush1.msra.mxu0 0.0
    %193 = vmatprep.subr.mxu0 0.0
    %194 = vmatpush1.msra.mxu0 0.0
    %195 = vmatprep.subr.mxu0 0.0
    %196 = vmatpush1.msra.mxu0 0.0
    %197 = vmatprep.subr.mxu0 0.0
    %198 = vmatpush1.msra.mxu0 0.0
    %199 = vmatprep.subr.mxu0 0.0
    %200 = vmatpush1.msra.mxu0 0.0
    %201 = vmatprep.subr.mxu0 0.0
    %202 = vmatpush1.msra.mxu0 0.0
    %203 = vmatprep.subr.mxu0 0.0
    %204 = vmatpush1.msra.mxu0 0.0
    %205 = vmatprep.subr.mxu0 0.0
    %206 = vmatpush1.msra.mxu0 0.0
    %207 = vmatprep.subr.mxu0 0.0
    %208 = vmatpush1.msra.mxu0 0.0
    %209 = vmatprep.subr.mxu0 0.0
    %210 = vmatpush1.msra.mxu0 0.0
    %211 = vmatprep.subr.mxu0 0.0
    %212 = vmatpush1.msra.mxu0 0.0
    %213 = vmatprep.subr.mxu0 0.0
    %214 = vmatpush1.msra.mxu0 0.0
    %215 = vmatprep.subr.mxu0 0.0
    %216 = vmatpush1.msra.mxu0 0.0
    %217 = vmatprep.subr.mxu0 0.0
    %218 = vmatpush1.msra.mxu0 0.0
    %219 = vmatprep.subr.mxu0 0.0
    %220 = vmatpush1.msra.mxu0 0.0
    %221 = vmatprep.subr.mxu0 0.0
    %222 = vmatpush1.msra.mxu0 0.0
    %223 = vmatprep.subr.mxu0 0.0
    %224 = vmatpush1.msra.mxu0 0.0
    %225 = vmatprep.subr.mxu0 0.0
    %226 = vmatpush1.msra.mxu0 0.0
    %227 = vmatprep.subr.mxu0 0.0
    %228 = vmatpush1.msra.mxu0 0.0
    %229 = vmatprep.subr.mxu0 0.0
    %230 = vmatpush1.msra.mxu0 0.0
    %231 = vmatprep.subr.mxu0 0.0
    %232 = vmatpush1.msra.mxu0 0.0
    %233 = vmatprep.mubr.f32.mxu0 0.0
    %234 = vmatmul.mubr.f32.gmra.mrb[0].mxu0 %v167
    %v235 = vpop.f32.mrb[0].mxu0
    %v236 = vadd.f32 %v162, %v235
    %v237 = vpop.f32.mrb[0].mxu0
    %238 = vdwg.mxu0
    %v239 = vld [vmem:[%s4] sm:$0x1]
    %v241 = vlaneseq
    %v242 = vshrl.u32 %v241, 7
    %v243 = vsub.s32 0, %v242
    %v244 = vrot.slane %v239, %v243
    %v246 = vadd.f32 %v236, %v244
    %v247 = vmax.f32 %v246, 0.0
    %v248 = vld [vmem:[#allocation9] sm:$0xff]
    %v249 = vld [vmem:[#allocation9 + $0x8] sm:$0xff]
    %v250 = vld [vmem:[#allocation9 + $0x10] sm:$0xff]
    %v251 = vld [vmem:[#allocation9 + $0x18] sm:$0xff]
    %v252 = vld [vmem:[%s6] sm:$0x1]
    %v254 = vlaneseq
    %v255 = vshrl.u32 %v254, 7
    %v256 = vsub.s32 0, %v255
    %v257 = vrot.slane %v252, %v256
    %vm259 = vcmask 261120
    %v261 = vsel %vm259, %v247, 0
    %263 = vmatprep.subr.mxu0 0.0
    %264 = vmatpush1.msra.mxu0 %v248
    %265 = vmatprep.subr.mxu0 0.0
    %266 = vmatpush1.msra.mxu0 %v249
    %267 = vmatprep.subr.mxu0 0.0
    %268 = vmatpush1.msra.mxu0 %v250
    %269 = vmatprep.subr.mxu0 0.0
    %270 = vmatpush1.msra.mxu0 %v251
    %271 = vmatprep.subr.mxu0 0.0
    %272 = vmatpush1.msra.mxu0 0.0
    %273 = vmatprep.subr.mxu0 0.0
    %274 = vmatpush1.msra.mxu0 0.0
    %275 = vmatprep.subr.mxu0 0.0
    %276 = vmatpush1.msra.mxu0 0.0
    %277 = vmatprep.subr.mxu0 0.0
    %278 = vmatpush1.msra.mxu0 0.0
    %279 = vmatprep.subr.mxu0 0.0
    %280 = vmatpush1.msra.mxu0 0.0
    %281 = vmatprep.subr.mxu0 0.0
    %282 = vmatpush1.msra.mxu0 0.0
    %283 = vmatprep.subr.mxu0 0.0
    %284 = vmatpush1.msra.mxu0 0.0
    %285 = vmatprep.subr.mxu0 0.0
    %286 = vmatpush1.msra.mxu0 0.0
    %287 = vmatprep.subr.mxu0 0.0
    %288 = vmatpush1.msra.mxu0 0.0
    %289 = vmatprep.subr.mxu0 0.0
    %290 = vmatpush1.msra.mxu0 0.0
    %291 = vmatprep.subr.mxu0 0.0
    %292 = vmatpush1.msra.mxu0 0.0
    %293 = vmatprep.subr.mxu0 0.0
    %294 = vmatpush1.msra.mxu0 0.0
    %295 = vmatprep.subr.mxu0 0.0
    %296 = vmatpush1.msra.mxu0 0.0
    %297 = vmatprep.subr.mxu0 0.0
    %298 = vmatpush1.msra.mxu0 0.0
    %299 = vmatprep.subr.mxu0 0.0
    %300 = vmatpush1.msra.mxu0 0.0
    %301 = vmatprep.subr.mxu0 0.0
    %302 = vmatpush1.msra.mxu0 0.0
    %303 = vmatprep.subr.mxu0 0.0
    %304 = vmatpush1.msra.mxu0 0.0
    %305 = vmatprep.subr.mxu0 0.0
    %306 = vmatpush1.msra.mxu0 0.0
    %307 = vmatprep.subr.mxu0 0.0
    %308 = vmatpush1.msra.mxu0 0.0
    %309 = vmatprep.subr.mxu0 0.0
    %310 = vmatpush1.msra.mxu0 0.0
    %311 = vmatprep.subr.mxu0 0.0
    %312 = vmatpush1.msra.mxu0 0.0
    %313 = vmatprep.subr.mxu0 0.0
    %314 = vmatpush1.msra.mxu0 0.0
    %315 = vmatprep.subr.mxu0 0.0
    %316 = vmatpush1.msra.mxu0 0.0
    %317 = vmatprep.subr.mxu0 0.0
    %318 = vmatpush1.msra.mxu0 0.0
    %319 = vmatprep.subr.mxu0 0.0
    %320 = vmatpush1.msra.mxu0 0.0
    %321 = vmatprep.subr.mxu0 0.0
    %322 = vmatpush1.msra.mxu0 0.0
    %323 = vmatprep.subr.mxu0 0.0
    %324 = vmatpush1.msra.mxu0 0.0
    %325 = vmatprep.subr.mxu0 0.0
    %326 = vmatpush1.msra.mxu0 0.0
    %327 = vmatprep.mubr.f32.mxu0 0.0
    %328 = vmatmul.mubr.f32.gmra.mrb[0].mxu0 %v261
    %v329 = vpop.f32.mrb[0].mxu0
    %v330 = vadd.f32 %v257, %v329
    %v331 = vpop.f32.mrb[0].mxu0
    %332 = vdwg.mxu0
    %v333 = vmax.f32 %v330, 0.0
    %v334 = vld [vmem:[%s7] sm:$0x1]
    %s335 = sld [smem:[#allocation2]]
    %v336 = vstv %s335
    %v338 = vsel %vm259, %v334, 0
    %v341 = vsel %vm259, %v333, 0
    %343 = vmatprep.subr.mxu0 0.0
    %344 = vmatpush1.xpose.msra.mxu0 %v341
    %345 = vmatprep.subr.mxu0 0.0
    %346 = vmatpush1.xpose.msra.mxu0 0.0
    %347 = vmatprep.subr.mxu0 0.0
    %348 = vmatpush1.xpose.msra.mxu0 0.0
    %349 = vmatprep.subr.mxu0 0.0
    %350 = vmatpush1.xpose.msra.mxu0 0.0
    %351 = vmatprep.subr.mxu0 0.0
    %352 = vmatpush1.xpose.msra.mxu0 0.0
    %353 = vmatprep.subr.mxu0 0.0
    %354 = vmatpush1.xpose.msra.mxu0 0.0
    %355 = vmatprep.subr.mxu0 0.0
    %356 = vmatpush1.xpose.msra.mxu0 0.0
    %357 = vmatprep.subr.mxu0 0.0
    %358 = vmatpush1.xpose.msra.mxu0 0.0
    %359 = vmatprep.subr.mxu0 0.0
    %360 = vmatpush1.xpose.msra.mxu0 0.0
    %361 = vmatprep.subr.mxu0 0.0
    %362 = vmatpush1.xpose.msra.mxu0 0.0
    %363 = vmatprep.subr.mxu0 0.0
    %364 = vmatpush1.xpose.msra.mxu0 0.0
    %365 = vmatprep.subr.mxu0 0.0
    %366 = vmatpush1.xpose.msra.mxu0 0.0
    %367 = vmatprep.subr.mxu0 0.0
    %368 = vmatpush1.xpose.msra.mxu0 0.0
    %369 = vmatprep.subr.mxu0 0.0
    %370 = vmatpush1.xpose.msra.mxu0 0.0
    %371 = vmatprep.subr.mxu0 0.0
    %372 = vmatpush1.xpose.msra.mxu0 0.0
    %373 = vmatprep.subr.mxu0 0.0
    %374 = vmatpush1.xpose.msra.mxu0 0.0
    %375 = vmatprep.subr.mxu0 0.0
    %376 = vmatpush1.xpose.msra.mxu0 0.0
    %377 = vmatprep.subr.mxu0 0.0
    %378 = vmatpush1.xpose.msra.mxu0 0.0
    %379 = vmatprep.subr.mxu0 0.0
    %380 = vmatpush1.xpose.msra.mxu0 0.0
    %381 = vmatprep.subr.mxu0 0.0
    %382 = vmatpush1.xpose.msra.mxu0 0.0
    %383 = vmatprep.subr.mxu0 0.0
    %384 = vmatpush1.xpose.msra.mxu0 0.0
    %385 = vmatprep.subr.mxu0 0.0
    %386 = vmatpush1.xpose.msra.mxu0 0.0
    %387 = vmatprep.subr.mxu0 0.0
    %388 = vmatpush1.xpose.msra.mxu0 0.0
    %389 = vmatprep.subr.mxu0 0.0
    %390 = vmatpush1.xpose.msra.mxu0 0.0
    %391 = vmatprep.subr.mxu0 0.0
    %392 = vmatpush1.xpose.msra.mxu0 0.0
    %393 = vmatprep.subr.mxu0 0.0
    %394 = vmatpush1.xpose.msra.mxu0 0.0
    %395 = vmatprep.subr.mxu0 0.0
    %396 = vmatpush1.xpose.msra.mxu0 0.0
    %397 = vmatprep.subr.mxu0 0.0
    %398 = vmatpush1.xpose.msra.mxu0 0.0
    %399 = vmatprep.subr.mxu0 0.0
    %400 = vmatpush1.xpose.msra.mxu0 0.0
    %401 = vmatprep.subr.mxu0 0.0
    %402 = vmatpush1.xpose.msra.mxu0 0.0
    %403 = vmatprep.subr.mxu0 0.0
    %404 = vmatpush1.xpose.msra.mxu0 0.0
    %405 = vmatprep.subr.mxu0 0.0
    %406 = vmatpush1.xpose.msra.mxu0 0.0
    %407 = vmatprep.mubr.f32.mxu0 0.0
    %408 = vmatmul.mubr.f32.gmra.mrb[0].mxu0 %v338
    %v409 = vpop.f32.mrb[0].mxu0
    %v410 = vadd.f32 %v336, %v409
    %v411 = vpop.f32.mrb[0].mxu0
    %412 = vdwg.mxu0
    %vm413 = vcmask 57344
    %414 = vst.msk [vmem:[#allocation11] sm:$0x1] %vm413, %v410
    // Predicated region
    $region54: #{critic_forward.1} parent=1 // pred_check
      _
    $region55: #{critic_forward.1} parent=1 // pred_check_branch
      %416 = sbr.rel (0) target = $region57
    $region56: #{critic_forward.1} parent=1 // pred_region
      %s418 = ssub.s32 16, 16
      %419 = vsyncadd [#allocation5], %s418
      %s421 = sshll.u32 [#allocation11], 4
      %s422 = int_to_ptr.vmem [resolvable:$true] %s421
      %424 = dma.vmem_to_hbm [thread:$0]  %s422, 16, %s9, [#allocation5]
    $region57: #{critic_forward.1} parent=1 // pred_fallthru
      _
    // Predicated region
    $region58: #{critic_forward.1} parent=1 // pred_check
      _
    $region59: #{critic_forward.1} parent=1 // pred_check_branch
      %426 = sbr.rel (0) target = $region61
    $region60: #{critic_forward.1} parent=1 // pred_region
      %427 = dma.done [#allocation5], 16
    $region61: #{critic_forward.1} parent=1 // pred_fallthru
      _
    %428 = vsyncpa [#allocation4], 1
    %429 = vsyncpa [#allocation7], 1
    %430 = vsyncpa [#allocation10], 1
    %431 = vsyncpa [#allocation5], 1

</llo_original>
